<compile_context>
chip_gen: v6e
topology: v6e:2x2x1
jax: 0.10.0
libtpu: 0.0.40
codegen_flags: <defaults>
</compile_context>

<pallas_src>
import jax
import jax.numpy as jnp
from jax import lax
from jax.experimental import pallas as pl
from jax.experimental.pallas import tpu as pltpu


def _embbag_linear_kernel(idx_ref, off_ref, fw_ref, o_ref):
    # idx_ref : (n_idx, 1)       int32 VMEM  -- indices, sublane-major
    # off_ref : (1, n_bags)      int32 VMEM  -- offsets, lane-major
    # fw_ref  : (dim, vocab + 2) f32   VMEM  -- [ emb.T | linear_w (col) | bias @ row 0 ]
    # o_ref   : (1, n_bags)      f32   VMEM  -- lane-dense output row
    n_idx = idx_ref.shape[0]
    n_bags = o_ref.shape[1]
    W = fw_ref.shape[1]          # vocab + 2
    vocab = W - 2

    idx_col = idx_ref[...]                               # (n_idx, 1)
    off_row = off_ref[...]                               # (1, n_bags)
    fw = fw_ref[...]                                     # (dim, vocab + 2), single vreg

    w_col = fw[:, vocab:vocab + 1]                       # (dim, 1)  Linear weight
    bias = fw[0:1, vocab + 1:vocab + 2]                  # (1, 1)    Linear bias

    # --- Fuse Linear into the table: embw[0, v] = sum_d emb[v, d] * w[d] -------------
    # Sublane reduce; lanes >= vocab hold garbage but are never selected below
    # (valid indices are < vocab).
    embw = jnp.sum(fw * w_col, axis=0, keepdims=True)    # (1, W)

    # --- Gather via one-hot compare (VPU) + lane reduce (XLU) ------------------------
    # Indices on sublanes, vocab on lanes; idx_col broadcasts along lanes.
    v_iota = lax.broadcasted_iota(jnp.int32, (n_idx, W), 1)
    onehot = v_iota == idx_col                                              # (n_idx, W)
    per_idx = jnp.sum(jnp.where(onehot, embw, 0.0), axis=1, keepdims=True)  # (n_idx, 1)

    # --- Bag membership without building `ends` --------------------------------------
    # For torch 1-D EmbeddingBag semantics (offsets[0]==0, non-decreasing),
    # index i belongs to bag (#{b : offsets[b] <= i}) - 1.
    i_iota = lax.broadcasted_iota(jnp.int32, (n_idx, n_bags), 0)
    ge = (i_iota >= off_row).astype(jnp.int32)                              # (n_idx, n_bags)
    bag_id = jnp.sum(ge, axis=1, keepdims=True) - 1                         # (n_idx, 1)
    b_iota = lax.broadcasted_iota(jnp.int32, (n_idx, n_bags), 1)
    seg = bag_id == b_iota                                                  # (n_idx, n_bags)

    # --- Bag sums straight into the lane-dense output row (+ bias broadcast) ---------
    bag_row = jnp.sum(jnp.where(seg, per_idx, 0.0), axis=0, keepdims=True)  # (1, n_bags)
    o_ref[...] = (bag_row + bias).astype(o_ref.dtype)


def embbag_linear(x, offsets, emb_weight, lin_weight, lin_bias):
    """x: (num_indices,) int; offsets: (num_bags,) int (torch 1-D EmbeddingBag semantics)."""
    num_indices = x.shape[0]
    num_bags = offsets.shape[0]
    vocab, dim = emb_weight.shape

    idx_col = x.astype(jnp.int32).reshape(num_indices, 1)        # sublane-major indices
    off_row = offsets.astype(jnp.int32).reshape(1, num_bags)     # lane-major offsets

    # Pack emb.T, the Linear weight column, and the bias into ONE f32 operand.
    fw = jnp.zeros((dim, vocab + 2), jnp.float32)
    fw = fw.at[:, :vocab].set(emb_weight.astype(jnp.float32).T)
    fw = fw.at[:, vocab].set(lin_weight.astype(jnp.float32).reshape(dim))
    fw = fw.at[0, vocab + 1].set(lin_bias.astype(jnp.float32)[0])

    vmem = pl.BlockSpec(memory_space=pltpu.MemorySpace.VMEM)

    out_row = pl.pallas_call(
        _embbag_linear_kernel,
        out_shape=jax.ShapeDtypeStruct((1, num_bags), jnp.float32),
        in_specs=[vmem, vmem, vmem],
        out_specs=vmem,
    )(idx_col, off_row, fw)
    # Lane-dense (1, num_bags) in-kernel; reshape back to torch's (num_bags, 1) in JAX.
    return out_row.reshape(num_bags, 1)


def _reference(x, offsets, emb_weight, lin_weight, lin_bias):
    num_indices = x.shape[0]
    ends = jnp.concatenate([offsets[1:], jnp.array([num_indices], dtype=offsets.dtype)])
    gathered = emb_weight[x]                                  # (num_indices, dim)
    j = jnp.arange(num_indices)[None, :]
    seg = (j >= offsets[:, None]) & (j < ends[:, None])
    bag_sums = jnp.where(seg[:, :, None], gathered[None, :, :], 0.0).sum(axis=1)
    return bag_sums @ lin_weight.T + lin_bias[None, :]


if __name__ == "__main__":
    key = jax.random.PRNGKey(0)
    k_idx, k_emb, k_w, k_b = jax.random.split(key, 4)

    vocab, dim = 10, 3
    num_indices = 8
    # 3 bags: [0:3), [3:5), [5:8)
    x = jax.random.randint(k_idx, (num_indices,), 0, vocab, dtype=jnp.int32)
    offsets = jnp.array([0, 3, 5], dtype=jnp.int32)

    # Deterministic parameter init (shapes match the torch module):
    emb_weight = jax.random.normal(k_emb, (vocab, dim), dtype=jnp.float32)
    bound = 1.0 / jnp.sqrt(jnp.float32(dim))
    lin_weight = jax.random.uniform(k_w, (1, dim), minval=-bound, maxval=bound, dtype=jnp.float32)
    lin_bias = jax.random.uniform(k_b, (1,), minval=-bound, maxval=bound, dtype=jnp.float32)

    out = embbag_linear(x, offsets, emb_weight, lin_weight, lin_bias)
    out = jax.block_until_ready(out)

    ref = _reference(x, offsets, emb_weight, lin_weight, lin_bias)
    assert out.shape == (3, 1), out.shape
    assert jnp.allclose(out, ref, atol=1e-5, rtol=1e-5), (out, ref)
    print("KERNEL_OK")
</pallas_src>

<mosaic_0001>
module attributes {stable_mosaic.version = 11 : i64} {
  func.func @_embbag_linear_kernel(%arg0: memref<8x1xi32, #tpu.memory_space<vmem>>, %arg1: memref<1x3xi32, #tpu.memory_space<vmem>>, %arg2: memref<3x12xf32, #tpu.memory_space<vmem>>, %arg3: memref<1x3xf32, #tpu.memory_space<vmem>>) attributes {dimension_semantics = [], scalar_prefetch = 0 : i64, scratch_operands = 0 : i64, tpu.core_type = #tpu.core_type<tc>} {
    %c0 = arith.constant 0 : index
    %c0_0 = arith.constant 0 : index
    %0 = vector.load %arg0[%c0, %c0_0] : memref<8x1xi32, #tpu.memory_space<vmem>>, vector<8x1xi32>
    %c0_1 = arith.constant 0 : index
    %c0_2 = arith.constant 0 : index
    %1 = vector.load %arg1[%c0_1, %c0_2] : memref<1x3xi32, #tpu.memory_space<vmem>>, vector<1x3xi32>
    %c0_3 = arith.constant 0 : index
    %c0_4 = arith.constant 0 : index
    %2 = vector.load %arg2[%c0_3, %c0_4] : memref<3x12xf32, #tpu.memory_space<vmem>>, vector<3x12xf32>
    %3 = vector.extract_strided_slice %2 {offsets = [0, 10], sizes = [3, 1], strides = [1, 1]} : vector<3x12xf32> to vector<3x1xf32>
    %4 = vector.extract_strided_slice %2 {offsets = [0, 11], sizes = [1, 1], strides = [1, 1]} : vector<3x12xf32> to vector<1x1xf32>
    %5 = vector.broadcast %3 : vector<3x1xf32> to vector<3x12xf32>
    %6 = arith.mulf %2, %5 : vector<3x12xf32>
    %cst = arith.constant dense<0.000000e+00> : vector<12xf32>
    %7 = vector.multi_reduction <add>, %6, %cst [0] : vector<3x12xf32> to vector<12xf32>
    %8 = vector.shape_cast %7 : vector<12xf32> to vector<1x12xf32>
    %9 = tpu.iota {dimensions = array<i32: 1>} : vector<8x12xi32>
    %10 = vector.broadcast %0 : vector<8x1xi32> to vector<8x12xi32>
    %11 = arith.cmpi eq, %9, %10 : vector<8x12xi32>
    %cst_5 = arith.constant 0.000000e+00 : f32
    %12 = vector.shape_cast %8 : vector<1x12xf32> to vector<1x12xf32>
    %13 = vector.broadcast %12 : vector<1x12xf32> to vector<8x12xf32>
    %14 = vector.broadcast %cst_5 : f32 to vector<8x12xf32>
    %15 = arith.select %11, %13, %14 : vector<8x12xi1>, vector<8x12xf32>
    %cst_6 = arith.constant dense<0.000000e+00> : vector<8xf32>
    %16 = vector.multi_reduction <add>, %15, %cst_6 [1] : vector<8x12xf32> to vector<8xf32>
    %17 = vector.shape_cast %16 : vector<8xf32> to vector<8x1xf32>
    %18 = tpu.iota {dimensions = array<i32: 0>} : vector<8x3xi32>
    %19 = vector.broadcast %1 : vector<1x3xi32> to vector<8x3xi32>
    %20 = arith.cmpi sge, %18, %19 : vector<8x3xi32>
    %21 = arith.extui %20 : vector<8x3xi1> to vector<8x3xi32>
    %cst_7 = arith.constant dense<0> : vector<8xi32>
    %22 = vector.multi_reduction <add>, %21, %cst_7 [1] : vector<8x3xi32> to vector<8xi32>
    %23 = vector.shape_cast %22 : vector<8xi32> to vector<8x1xi32>
    %c1_i32 = arith.constant 1 : i32
    %24 = vector.broadcast %c1_i32 : i32 to vector<8x1xi32>
    %25 = arith.subi %23, %24 : vector<8x1xi32>
    %26 = tpu.iota {dimensions = array<i32: 1>} : vector<8x3xi32>
    %27 = vector.broadcast %25 : vector<8x1xi32> to vector<8x3xi32>
    %28 = arith.cmpi eq, %27, %26 : vector<8x3xi32>
    %cst_8 = arith.constant 0.000000e+00 : f32
    %29 = vector.shape_cast %17 : vector<8x1xf32> to vector<8x1xf32>
    %30 = vector.broadcast %29 : vector<8x1xf32> to vector<8x3xf32>
    %31 = vector.broadcast %cst_8 : f32 to vector<8x3xf32>
    %32 = arith.select %28, %30, %31 : vector<8x3xi1>, vector<8x3xf32>
    %cst_9 = arith.constant dense<0.000000e+00> : vector<3xf32>
    %33 = vector.multi_reduction <add>, %32, %cst_9 [0] : vector<8x3xf32> to vector<3xf32>
    %34 = vector.shape_cast %33 : vector<3xf32> to vector<1x3xf32>
    %35 = vector.broadcast %4 : vector<1x1xf32> to vector<1x3xf32>
    %36 = arith.addf %34, %35 : vector<1x3xf32>
    %c0_10 = arith.constant 0 : index
    %c0_11 = arith.constant 0 : index
    %37 = vector.load %arg3[%c0_10, %c0_11] : memref<1x3xf32, #tpu.memory_space<vmem>>, vector<1x3xf32>
    tpu.vector_store %arg3[%c0_10, %c0_11], %36 {strides = array<i32>} : memref<1x3xf32, #tpu.memory_space<vmem>>, vector<1x3xf32>,
    return
  }
}

</mosaic_0001>

<llo_original>
// kernel: tpu_custom_call.1
$region0: #{tpu_custom_call.1}
  #allocation0 [shape = 'u32[]', space=smem, size = 0x4, offset = 0x4, fixed_abs, tag = 'smem constant byte address 0x4 - core index']
  #allocation1 [shape = 'u32[144,128]{1,0:T(1,128)}', space=vmem, size = 0x12000, scoped, tag = 'internal scratch']
  %s0 = inlined_call_operand.vmem [shape: s32[8,1], index: 0, kind: input, shape index: {}]
  %s1 = inlined_call_operand.vmem [shape: s32[1,3], index: 1, kind: input, shape index: {}]
  %s2 = inlined_call_operand.vmem [shape: f32[3,12], index: 2, kind: input, shape index: {}]
  %s3 = inlined_call_operand.hbm [shape: f32[1,3], index: 3, kind: output, shape index: {}]
  %s4 = sld [smem:[#allocation0]]
  $region22: #{tpu_custom_call.1} parent=0
    _
  %s6 = ssub.s32 1, %s4
  %s7 = scalar_select 0, %s6, %s4
  $region1: #{tpu_custom_call.1} parent=0
    #allocation2 [shape = 'u8[512]{0}', space=vmem, size = 0x400, scoped, tag = 'output window, operand 0, single buffered']
    #allocation3 [shape = 's32[1]{0}', space=sflag, size = 0x4, scoped, tag = 'scoped memory for tpu_custom_call.1']
    %8 = vsyncpa [#allocation3], 0
    // Predicated region
    $region2: #{tpu_custom_call.1} parent=1 // pred_check
      _
    $region3: #{tpu_custom_call.1} parent=1 // pred_check_branch
      %10 = sbr.rel (0) target = $region5
    $region4: #{tpu_custom_call.1} parent=1 // pred_region
      _
    $region5: #{tpu_custom_call.1} parent=1 // pred_fallthru
      _
    // Predicated region
    $region6: #{tpu_custom_call.1} parent=1 // pred_check
      _
    $region7: #{tpu_custom_call.1} parent=1 // pred_check_branch
      %12 = sbr.rel (0) target = $region9
    $region8: #{tpu_custom_call.1} parent=1 // pred_region
      _
    $region9: #{tpu_custom_call.1} parent=1 // pred_fallthru
      _
    // Predicated region
    $region10: #{tpu_custom_call.1} parent=1 // pred_check
      _
    $region11: #{tpu_custom_call.1} parent=1 // pred_check_branch
      %14 = sbr.rel (0) target = $region13
    $region12: #{tpu_custom_call.1} parent=1 // pred_region
      _
    $region13: #{tpu_custom_call.1} parent=1 // pred_fallthru
      _
    %v15 = vld [vmem:[%s0] sm:$0xff]
    %v16 = vld [vmem:[%s1] sm:$0x1]
    %v17 = vld [vmem:[%s2] sm:$0x7]
    %19 = vset.pattern.permute.xlu0 10
    %20 = vperm.xlu0 %19, %v17
    %v21 = vpop.permute.xlu0 %20
    %v23 = vmul.f32 %v17, %v21
    %vm24 = vcmask 92160
    %v25 = vsel %vm24, %v23, 0.0
    %v26 = vrot.slane %v25, 4
    %v27 = vadd.f32 %v25, %v26
    %v28 = vrot.slane %v27, 2
    %v29 = vadd.f32 %v27, %v28
    %v30 = vrot.slane %v29, 1
    %v31 = vadd.f32 %v29, %v30
    %v32 = vlaneseq
    %v33 = vand.u32 %v32, 127
    %34 = vset.pattern.permute.xlu0 0
    %35 = vperm.xlu0 %34, %v15
    %v36 = vpop.permute.xlu0 %35
    %vm37 = vcmp.eq.s32.totalorder %v33, %v36
    %v38 = vsel %vm37, %v31, 0.0
    %vm39 = vcmask 97280
    %v40 = vsel %vm39, %v38, 0.0
    %41 = vadd.xlane.f32.xlu0 %v40
    %v42 = vpop.xlane.xlu0 %41
    %v43 = vlaneseq
    %v44 = vshrl.u32 %v43, 7
    %v45 = vlaneseq
    %v46 = vshrl.u32 %v45, 7
    %v47 = vsub.s32 0, %v46
    %v48 = vrot.slane %v16, %v47
    %vm49 = vcmp.ge.s32.totalorder %v44, %v48
    %v50 = vsel %vm49, 1, 0
    %vm51 = vcmask 23552
    %v52 = vsel %vm51, %v50, 0
    %v53 = vand.u32 %v52, 65535
    %v54 = vshrl.u32 %v52, 16
    %v55 = vcvt.s32.f32 %v53
    %v56 = vcvt.s32.f32 %v54
    %57 = vadd.xlane.f32.xlu0 %v55
    %v58 = vpop.xlane.xlu0 %57
    %59 = vadd.xlane.f32.xlu0 %v56
    %v60 = vpop.xlane.xlu0 %59
    %v61 = vcvt.f32.s32 %v58
    %v62 = vcvt.f32.s32 %v60
    %v63 = vshll.u32 %v62, 16
    %v64 = vadd.s32 %v63, %v61
    %v65 = vsub.s32 %v64, 1
    %vm66 = vcmp.eq.s32.totalorder %v65, %v33
    %v67 = vsel %vm66, %v42, 0.0
    %v68 = vsel %vm51, %v67, 0.0
    %v69 = vrot.slane %v68, 4
    %v70 = vadd.f32 %v68, %v69
    %v71 = vrot.slane %v70, 2
    %v72 = vadd.f32 %v70, %v71
    %v73 = vrot.slane %v72, 1
    %v74 = vadd.f32 %v72, %v73
    %75 = vset.pattern.permute.xlu0 11
    %76 = vperm.xlu0 %75, %v17
    %v77 = vpop.permute.xlu0 %76
    %v79 = vadd.f32 %v74, %v77
    %vm80 = vcmask 16384
    %81 = vst.msk [vmem:[#allocation2] sm:$0x1] %vm80, %v79
    // Predicated region
    $region14: #{tpu_custom_call.1} parent=1 // pred_check
      _
    $region15: #{tpu_custom_call.1} parent=1 // pred_check_branch
      %83 = sbr.rel (0) target = $region17
    $region16: #{tpu_custom_call.1} parent=1 // pred_region
      %s85 = ssub.s32 16, 16
      %86 = vsyncadd [#allocation3], %s85
      %s88 = sshll.u32 [#allocation2], 4
      %s89 = int_to_ptr.vmem [resolvable:$true] %s88
      %91 = dma.vmem_to_hbm [thread:$0]  %s89, 16, %s3, [#allocation3]
    $region17: #{tpu_custom_call.1} parent=1 // pred_fallthru
      _
    // Predicated region
    $region18: #{tpu_custom_call.1} parent=1 // pred_check
      _
    $region19: #{tpu_custom_call.1} parent=1 // pred_check_branch
      %93 = sbr.rel (0) target = $region21
    $region20: #{tpu_custom_call.1} parent=1 // pred_region
      %94 = dma.done [#allocation3], 16
    $region21: #{tpu_custom_call.1} parent=1 // pred_fallthru
      _
    %95 = vsyncpa [#allocation3], 1

</llo_original>
